<compile_context>
chip_gen: v7x
topology: tpu7x:2x2x1
jax: 0.10.0
libtpu: 0.0.40
codegen_flags: <defaults>
</compile_context>

<pallas_src>
import functools

import jax
import jax.numpy as jnp
from jax.experimental import pallas as pl
from jax.experimental.pallas import tpu as pltpu


_VMEM_LIMIT = 64 * 1024 * 1024


def _softmax_last(x):
    x = x - jnp.max(x, axis=-1, keepdims=True)
    e = jnp.exp(x)
    return e / jnp.sum(e, axis=-1, keepdims=True)


def _pick_seq_tile(n_pad, target=512):
    """Largest multiple-of-8 divisor of n_pad that is <= target (else n_pad)."""
    if n_pad <= target:
        return n_pad
    start = target - (target % 8)
    for cand in range(start, 7, -8):
        if n_pad % cand == 0:
            return cand
    return n_pad


# --------------------------- kernel 1: QKV projection ------------------------

def _qkv_proj_kernel(x_ref, w_ref, q_ref, k_ref, v_ref, *, heads, dim_head, scale):
    # x_ref: (1, tn, dim) bf16 ; w_ref: (dim, 3*heads*dim_head) bf16 (whole)
    acc = jnp.dot(x_ref[0], w_ref[...], preferred_element_type=jnp.float32)
    d = dim_head
    for hi in range(heads):
        q_ref[0, hi] = (acc[:, hi * d:(hi + 1) * d] * scale).astype(q_ref.dtype)
        k_ref[0, hi] = acc[:, (heads + hi) * d:(heads + hi + 1) * d].astype(k_ref.dtype)
        v_ref[0, hi] = acc[:, (2 * heads + hi) * d:(2 * heads + hi + 1) * d].astype(v_ref.dtype)


# --------------------------- kernel 2: landmarks ------------------------------

def _landmark_kernel(q_ref, k_ref, v_ref, pool_ref, wconv_ref,
                     klm_ref, attn2_ref, a3v_ref, resv_ref, cmax_ref, rmax_ref,
                     *, l, k_conv, pad_conv):
    hi = pl.program_id(1)

    q = q_ref[0, 0]                       # (n, d) bf16 (already scaled)
    k = k_ref[0, 0]                       # (n, d) bf16
    v = v_ref[0, 0]                       # (n, d) bf16
    n = q.shape[0]
    pool = pool_ref[...]                  # (m, n) bf16

    inv_l = 1.0 / float(l)
    q_lm = jnp.dot(pool, q, preferred_element_type=jnp.float32) * inv_l   # (m, d)
    k_lm = jnp.dot(pool, k, preferred_element_type=jnp.float32) * inv_l   # (m, d)
    klm_ref[0, 0] = k_lm.astype(klm_ref.dtype)

    # attn2 (f32, feeds Newton-Schulz pinv)
    sim2 = jax.lax.dot_general(q_lm, k_lm, (((1,), (1,)), ((), ())),
                               preferred_element_type=jnp.float32)        # (m, m)
    attn2 = _softmax_last(sim2)
    attn2_ref[0, 0] = attn2

    # per-(b,h) max abs row/col sums for the Moore-Penrose init scalar
    abs2 = jnp.abs(attn2)
    cmax_ref[0, 0] = jnp.max(jnp.sum(abs2, axis=-1, keepdims=True), axis=0,
                             keepdims=True)
    rmax_ref[0, 0] = jnp.max(jnp.sum(abs2, axis=0, keepdims=True), axis=-1,
                             keepdims=True)

    # attn3 @ v
    sim3 = jax.lax.dot_general(q_lm.astype(jnp.bfloat16), k,
                               (((1,), (1,)), ((), ())),
                               preferred_element_type=jnp.float32)        # (m, n)
    attn3 = _softmax_last(sim3)
    a3v_ref[0, 0] = jnp.dot(attn3.astype(jnp.bfloat16), v,
                            preferred_element_type=jnp.float32)           # (m, d)

    # depthwise residual conv along seq: out[i] = sum_t w[h,t] * v[i + t - pad]
    # implemented as k_conv shifted adds (roll + edge mask for zero padding).
    vf = v.astype(jnp.float32)
    rows = jax.lax.broadcasted_iota(jnp.int32, (n, 1), 0)
    acc = jnp.zeros((n, vf.shape[1]), jnp.float32)
    for t in range(k_conv):
        shift = t - pad_conv
        w_t = wconv_ref[hi, t]
        if shift == 0:
            acc = acc + w_t * vf
        else:
            rolled = pltpu.roll(vf, (-shift) % n, axis=0)   # rolled[i] = vf[(i+shift) % n]
            valid = jnp.logical_and(rows + shift >= 0, rows + shift < n)
            acc = acc + w_t * jnp.where(valid, rolled, 0.0)
    resv_ref[0, 0] = acc.astype(resv_ref.dtype)


# --------------------------- kernel 3: pinv + attention output ----------------

def _attn_out_kernel(denom_ref, q_ref, klm_ref, attn2_ref, a3v_ref, resv_ref,
                     out_ref, w2_ref, *, m, pinv_iters):
    ni = pl.program_id(2)

    @pl.when(ni == 0)
    def _():
        denom = denom_ref[0, 0]
        a2 = attn2_ref[0, 0]                              # (m, m) f32
        ri = jax.lax.broadcasted_iota(jnp.int32, (m, m), 0)
        ci = jax.lax.broadcasted_iota(jnp.int32, (m, m), 1)
        eye = (ri == ci).astype(jnp.float32)
        z = a2.T / denom
        for _ in range(pinv_iters):
            xz = jnp.dot(a2, z, preferred_element_type=jnp.float32)
            t1 = 7.0 * eye - xz
            t2 = 15.0 * eye - jnp.dot(xz, t1, preferred_element_type=jnp.float32)
            t3 = 13.0 * eye - jnp.dot(xz, t2, preferred_element_type=jnp.float32)
            z = 0.25 * jnp.dot(z, t3, preferred_element_type=jnp.float32)
        # reassociated chain: cache w2 = pinv(attn2) @ (attn3 @ v)   (m, d)
        w2_ref[...] = jnp.dot(z, a3v_ref[0, 0],
                              preferred_element_type=jnp.float32).astype(w2_ref.dtype)

    q_t = q_ref[0, 0]                                      # (tn, d) bf16, pre-scaled
    sim1 = jax.lax.dot_general(q_t, klm_ref[0, 0], (((1,), (1,)), ((), ())),
                               preferred_element_type=jnp.float32)        # (tn, m)
    attn1 = _softmax_last(sim1)
    out_t = jnp.dot(attn1.astype(jnp.bfloat16), w2_ref[...],
                    preferred_element_type=jnp.float32)                   # (tn, d)
    out_ref[0, 0] = (out_t + resv_ref[0, 0].astype(jnp.float32)).astype(out_ref.dtype)


# --------------------------- kernel 4: merge-heads + output projection --------

def _out_proj_kernel(x_ref, w_ref, b_ref, o_ref, acc_ref):
    hi = pl.program_id(2)

    @pl.when(hi == 0)
    def _():
        acc_ref[...] = jnp.zeros_like(acc_ref)

    acc_ref[...] += jnp.dot(x_ref[0, 0], w_ref[0],
                            preferred_element_type=jnp.float32)

    @pl.when(hi == pl.num_programs(2) - 1)
    def _():
        o_ref[0] = (acc_ref[...] + b_ref[...]).astype(o_ref.dtype)


# ----------------------------- Nystrom attention forward ----------------------

def nystrom_attention_forward(x, params, *, heads, dim_head, num_landmarks,
                              pinv_iters, conv_kernel):
    b, n, dim = x.shape
    m = num_landmarks
    d = dim_head
    scale = d ** -0.5
    inner = heads * d

    remainder = n % m
    if remainder > 0:
        x = jnp.pad(x, ((0, 0), (m - remainder, 0), (0, 0)))
    n_pad = x.shape[1]
    l = n_pad // m                      # == ceil(n / m)

    tn = _pick_seq_tile(n_pad)
    ntiles = n_pad // tn

    x_bf = x.astype(jnp.bfloat16)
    w_qkv_bf = params["w_qkv"].astype(jnp.bfloat16)            # (dim, 3*inner)

    cparams2 = pltpu.CompilerParams(
        dimension_semantics=("parallel", "parallel"),
        vmem_limit_bytes=_VMEM_LIMIT)
    cparams3 = pltpu.CompilerParams(
        dimension_semantics=("parallel", "parallel", "arbitrary"),
        vmem_limit_bytes=_VMEM_LIMIT)

    vmem_spec = pl.BlockSpec(memory_space=pltpu.MemorySpace.VMEM)
    smem_spec = pl.BlockSpec(memory_space=pltpu.MemorySpace.SMEM)

    # ---- 1) QKV projection: writes q/k/v directly in (b, h, n_pad, d) bf16 ----
    qkv_out_spec = pl.BlockSpec((1, heads, tn, d), lambda bi, ni: (bi, 0, ni, 0))
    q, k, v = pl.pallas_call(
        functools.partial(_qkv_proj_kernel, heads=heads, dim_head=d, scale=scale),
        out_shape=(jax.ShapeDtypeStruct((b, heads, n_pad, d), jnp.bfloat16),
                   jax.ShapeDtypeStruct((b, heads, n_pad, d), jnp.bfloat16),
                   jax.ShapeDtypeStruct((b, heads, n_pad, d), jnp.bfloat16)),
        grid=(b, ntiles),
        in_specs=[pl.BlockSpec((1, tn, dim), lambda bi, ni: (bi, ni, 0)),
                  vmem_spec],
        out_specs=(qkv_out_spec, qkv_out_spec, qkv_out_spec),
        compiler_params=cparams2,
    )(x_bf, w_qkv_bf)

    # ---- landmark pooling matrix, built once in the wrapper (bf16) ----
    rows = jnp.arange(m, dtype=jnp.int32).reshape(m, 1)
    cols = jnp.arange(n_pad, dtype=jnp.int32).reshape(1, n_pad)
    pool = (cols // l == rows).astype(jnp.bfloat16)            # (m, n_pad)

    # ---- 2) landmarks, attn2, attn3@v, residual conv, per-(b,h) stats ----
    bh_nd = pl.BlockSpec((1, 1, n_pad, d), lambda bi, hi: (bi, hi, 0, 0))
    bh_md = pl.BlockSpec((1, 1, m, d), lambda bi, hi: (bi, hi, 0, 0))
    bh_mm = pl.BlockSpec((1, 1, m, m), lambda bi, hi: (bi, hi, 0, 0))
    bh_11 = pl.BlockSpec((1, 1, 1, 1), lambda bi, hi: (bi, hi, 0, 0))

    k_lm, attn2, a3v, resv, cmax, rmax = pl.pallas_call(
        functools.partial(_landmark_kernel, l=l, k_conv=conv_kernel,
                          pad_conv=conv_kernel // 2),
        out_shape=(
            jax.ShapeDtypeStruct((b, heads, m, d), jnp.bfloat16),
            jax.ShapeDtypeStruct((b, heads, m, m), jnp.float32),
            jax.ShapeDtypeStruct((b, heads, m, d), jnp.float32),
            jax.ShapeDtypeStruct((b, heads, n_pad, d), jnp.bfloat16),
            jax.ShapeDtypeStruct((b, heads, 1, 1), jnp.float32),
            jax.ShapeDtypeStruct((b, heads, 1, 1), jnp.float32),
        ),
        grid=(b, heads),
        in_specs=[bh_nd, bh_nd, bh_nd, vmem_spec, smem_spec],
        out_specs=(bh_md, bh_mm, bh_md, bh_nd, bh_11, bh_11),
        compiler_params=cparams2,
    )(q, k, v, pool, params["w_conv"])

    # ---- global Moore-Penrose init scalar (torch.max over whole tensor) ----
    denom = (jnp.max(cmax) * jnp.max(rmax)).reshape(1, 1).astype(jnp.float32)

    # ---- 3) pinv (cached per (b,h)) + seq-tiled attention output ----
    t_nd = pl.BlockSpec((1, 1, tn, d), lambda bi, hi, ni: (bi, hi, ni, 0))
    c_md = pl.BlockSpec((1, 1, m, d), lambda bi, hi, ni: (bi, hi, 0, 0))
    c_mm = pl.BlockSpec((1, 1, m, m), lambda bi, hi, ni: (bi, hi, 0, 0))

    out_heads = pl.pallas_call(
        functools.partial(_attn_out_kernel, m=m, pinv_iters=pinv_iters),
        out_shape=jax.ShapeDtypeStruct((b, heads, n_pad, d), jnp.bfloat16),
        grid=(b, heads, ntiles),
        in_specs=[smem_spec, t_nd, c_md, c_mm, c_md, t_nd],
        out_specs=t_nd,
        scratch_shapes=[pltpu.VMEM((m, d), jnp.bfloat16)],
        compiler_params=cparams3,
    )(denom, q, k_lm, attn2, a3v, resv)

    # ---- 4) fused merge-heads + output projection (+ bias) ----
    w_out_h = params["w_out"].reshape(heads, d, dim).astype(jnp.bfloat16)
    out = pl.pallas_call(
        _out_proj_kernel,
        out_shape=jax.ShapeDtypeStruct((b, n_pad, dim), jnp.float32),
        grid=(b, ntiles, heads),
        in_specs=[pl.BlockSpec((1, 1, tn, d), lambda bi, ni, hi: (bi, hi, ni, 0)),
                  pl.BlockSpec((1, d, dim), lambda bi, ni, hi: (hi, 0, 0)),
                  vmem_spec],
        out_specs=pl.BlockSpec((1, tn, dim), lambda bi, ni, hi: (bi, ni, 0)),
        scratch_shapes=[pltpu.VMEM((tn, dim), jnp.float32)],
        compiler_params=cparams3,
    )(out_heads, w_out_h, params["b_out"])

    # TODO(synk): Dropout(p=0.0) is an identity in eval/this config; not translated.
    return out[:, -n:]


# ----------------------------- demo / init ----------------------------------

if __name__ == "__main__":
    # small, module-consistent shapes
    batch = 2
    seq = 6                 # n % num_landmarks != 0 -> exercises front padding
    dim = 32
    heads = 4
    dim_head = 8
    num_landmarks = 4
    pinv_iters = 6
    conv_kernel = 7         # residual_conv_kernel
    inner = heads * dim_head

    key = jax.random.PRNGKey(0)
    k1, k2, k3, k4, k5 = jax.random.split(key, 5)
    params = {
        "w_qkv": jax.random.normal(k1, (dim, 3 * inner), jnp.float32) * 0.05,
        "w_out": jax.random.normal(k2, (inner, dim), jnp.float32) * 0.05,
        "b_out": jax.random.normal(k3, (1, dim), jnp.float32) * 0.05,
        "w_conv": jax.random.normal(k4, (heads, conv_kernel), jnp.float32) * 0.05,
    }
    x = jax.random.normal(k5, (batch, seq, dim), jnp.float32)

    out = nystrom_attention_forward(
        x, params,
        heads=heads, dim_head=dim_head, num_landmarks=num_landmarks,
        pinv_iters=pinv_iters, conv_kernel=conv_kernel,
    )
    jax.block_until_ready(out)
    assert out.shape == (batch, seq, dim)
    print("KERNEL_OK")
</pallas_src>

<mosaic_0001>
module attributes {stable_mosaic.version = 11 : i64} {
  func.func @_qkv_proj_kernel(%arg0: i32, %arg1: i32, %arg2: memref<1x8x32xbf16, #tpu.memory_space<vmem>>, %arg3: memref<32x96xbf16, #tpu.memory_space<vmem>>, %arg4: memref<1x4x8x8xbf16, #tpu.memory_space<vmem>>, %arg5: memref<1x4x8x8xbf16, #tpu.memory_space<vmem>>, %arg6: memref<1x4x8x8xbf16, #tpu.memory_space<vmem>>) attributes {dimension_semantics = [#tpu.dimension_semantics<parallel>, #tpu.dimension_semantics<parallel>], iteration_bounds = array<i64: 2, 1>, scalar_prefetch = 0 : i64, scratch_operands = 0 : i64, tpu.core_type = #tpu.core_type<tc>, window_params = [{transform_indices = @transform_0, window_bounds = array<i64: 1, 8, 32>}, {pipeline_mode = #tpu.pipeline_mode<synchronous>, transform_indices = @transform_1, window_bounds = array<i64: 32, 96>}, {transform_indices = @transform_2, window_bounds = array<i64: 1, 4, 8, 8>}, {transform_indices = @transform_3, window_bounds = array<i64: 1, 4, 8, 8>}, {transform_indices = @transform_4, window_bounds = array<i64: 1, 4, 8, 8>}]} {
    %c0 = arith.constant 0 : index
    %c0_0 = arith.constant 0 : index
    %c0_1 = arith.constant 0 : index
    %0 = vector.load %arg2[%c0, %c0_0, %c0_1] : memref<1x8x32xbf16, #tpu.memory_space<vmem>>, vector<1x8x32xbf16>
    %1 = vector.shape_cast %0 : vector<1x8x32xbf16> to vector<8x32xbf16>
    %c0_2 = arith.constant 0 : index
    %c0_3 = arith.constant 0 : index
    %2 = vector.load %arg3[%c0_2, %c0_3] : memref<32x96xbf16, #tpu.memory_space<vmem>>, vector<32x96xbf16>
    %cst = arith.constant dense<0.000000e+00> : vector<8x96xf32>
    %3 = tpu.matmul %1, %2, %cst {dimension_numbers = #tpu.dot_dimension_numbers<[1], [0], [0], [1], [0, 0, 1, 1], [], []>} : vector<8x32xbf16>, vector<32x96xbf16>, vector<8x96xf32> -> vector<8x96xf32>
    %4 = vector.extract_strided_slice %3 {offsets = [0, 0], sizes = [8, 8], strides = [1, 1]} : vector<8x96xf32> to vector<8x8xf32>
    %cst_4 = arith.constant 0.353553385 : f32
    %5 = vector.broadcast %cst_4 : f32 to vector<8x8xf32>
    %6 = arith.mulf %4, %5 : vector<8x8xf32>
    %7 = arith.truncf %6 : vector<8x8xf32> to vector<8x8xbf16>
    %c0_5 = arith.constant 0 : index
    %c0_6 = arith.constant 0 : index
    %c0_7 = arith.constant 0 : index
    %c0_8 = arith.constant 0 : index
    %8 = vector.load %arg4[%c0_5, %c0_6, %c0_7, %c0_8] : memref<1x4x8x8xbf16, #tpu.memory_space<vmem>>, vector<1x1x8x8xbf16>
    %9 = vector.shape_cast %8 : vector<1x1x8x8xbf16> to vector<8x8xbf16>
    %10 = vector.shape_cast %7 : vector<8x8xbf16> to vector<1x1x8x8xbf16>
    tpu.vector_store %arg4[%c0_5, %c0_6, %c0_7, %c0_8], %10 {strides = array<i32>} : memref<1x4x8x8xbf16, #tpu.memory_space<vmem>>, vector<1x1x8x8xbf16>,
    %11 = vector.extract_strided_slice %3 {offsets = [0, 32], sizes = [8, 8], strides = [1, 1]} : vector<8x96xf32> to vector<8x8xf32>
    %12 = arith.truncf %11 : vector<8x8xf32> to vector<8x8xbf16>
    %c0_9 = arith.constant 0 : index
    %c0_10 = arith.constant 0 : index
    %c0_11 = arith.constant 0 : index
    %c0_12 = arith.constant 0 : index
    %13 = vector.load %arg5[%c0_9, %c0_10, %c0_11, %c0_12] : memref<1x4x8x8xbf16, #tpu.memory_space<vmem>>, vector<1x1x8x8xbf16>
    %14 = vector.shape_cast %13 : vector<1x1x8x8xbf16> to vector<8x8xbf16>
    %15 = vector.shape_cast %12 : vector<8x8xbf16> to vector<1x1x8x8xbf16>
    tpu.vector_store %arg5[%c0_9, %c0_10, %c0_11, %c0_12], %15 {strides = array<i32>} : memref<1x4x8x8xbf16, #tpu.memory_space<vmem>>, vector<1x1x8x8xbf16>,
    %16 = vector.extract_strided_slice %3 {offsets = [0, 64], sizes = [8, 8], strides = [1, 1]} : vector<8x96xf32> to vector<8x8xf32>
    %17 = arith.truncf %16 : vector<8x8xf32> to vector<8x8xbf16>
    %c0_13 = arith.constant 0 : index
    %c0_14 = arith.constant 0 : index
    %c0_15 = arith.constant 0 : index
    %c0_16 = arith.constant 0 : index
    %18 = vector.load %arg6[%c0_13, %c0_14, %c0_15, %c0_16] : memref<1x4x8x8xbf16, #tpu.memory_space<vmem>>, vector<1x1x8x8xbf16>
    %19 = vector.shape_cast %18 : vector<1x1x8x8xbf16> to vector<8x8xbf16>
    %20 = vector.shape_cast %17 : vector<8x8xbf16> to vector<1x1x8x8xbf16>
    tpu.vector_store %arg6[%c0_13, %c0_14, %c0_15, %c0_16], %20 {strides = array<i32>} : memref<1x4x8x8xbf16, #tpu.memory_space<vmem>>, vector<1x1x8x8xbf16>,
    %21 = vector.extract_strided_slice %3 {offsets = [0, 8], sizes = [8, 8], strides = [1, 1]} : vector<8x96xf32> to vector<8x8xf32>
    %cst_17 = arith.constant 0.353553385 : f32
    %22 = vector.broadcast %cst_17 : f32 to vector<8x8xf32>
    %23 = arith.mulf %21, %22 : vector<8x8xf32>
    %24 = arith.truncf %23 : vector<8x8xf32> to vector<8x8xbf16>
    %c0_18 = arith.constant 0 : index
    %c1 = arith.constant 1 : index
    %c0_19 = arith.constant 0 : index
    %c0_20 = arith.constant 0 : index
    %25 = vector.load %arg4[%c0_18, %c1, %c0_19, %c0_20] : memref<1x4x8x8xbf16, #tpu.memory_space<vmem>>, vector<1x1x8x8xbf16>
    %26 = vector.shape_cast %25 : vector<1x1x8x8xbf16> to vector<8x8xbf16>
    %27 = vector.shape_cast %24 : vector<8x8xbf16> to vector<1x1x8x8xbf16>
    tpu.vector_store %arg4[%c0_18, %c1, %c0_19, %c0_20], %27 {strides = array<i32>} : memref<1x4x8x8xbf16, #tpu.memory_space<vmem>>, vector<1x1x8x8xbf16>,
    %28 = vector.extract_strided_slice %3 {offsets = [0, 40], sizes = [8, 8], strides = [1, 1]} : vector<8x96xf32> to vector<8x8xf32>
    %29 = arith.truncf %28 : vector<8x8xf32> to vector<8x8xbf16>
    %c0_21 = arith.constant 0 : index
    %c1_22 = arith.constant 1 : index
    %c0_23 = arith.constant 0 : index
    %c0_24 = arith.constant 0 : index
    %30 = vector.load %arg5[%c0_21, %c1_22, %c0_23, %c0_24] : memref<1x4x8x8xbf16, #tpu.memory_space<vmem>>, vector<1x1x8x8xbf16>
    %31 = vector.shape_cast %30 : vector<1x1x8x8xbf16> to vector<8x8xbf16>
    %32 = vector.shape_cast %29 : vector<8x8xbf16> to vector<1x1x8x8xbf16>
    tpu.vector_store %arg5[%c0_21, %c1_22, %c0_23, %c0_24], %32 {strides = array<i32>} : memref<1x4x8x8xbf16, #tpu.memory_space<vmem>>, vector<1x1x8x8xbf16>,
    %33 = vector.extract_strided_slice %3 {offsets = [0, 72], sizes = [8, 8], strides = [1, 1]} : vector<8x96xf32> to vector<8x8xf32>
    %34 = arith.truncf %33 : vector<8x8xf32> to vector<8x8xbf16>
    %c0_25 = arith.constant 0 : index
    %c1_26 = arith.constant 1 : index
    %c0_27 = arith.constant 0 : index
    %c0_28 = arith.constant 0 : index
    %35 = vector.load %arg6[%c0_25, %c1_26, %c0_27, %c0_28] : memref<1x4x8x8xbf16, #tpu.memory_space<vmem>>, vector<1x1x8x8xbf16>
    %36 = vector.shape_cast %35 : vector<1x1x8x8xbf16> to vector<8x8xbf16>
    %37 = vector.shape_cast %34 : vector<8x8xbf16> to vector<1x1x8x8xbf16>
    tpu.vector_store %arg6[%c0_25, %c1_26, %c0_27, %c0_28], %37 {strides = array<i32>} : memref<1x4x8x8xbf16, #tpu.memory_space<vmem>>, vector<1x1x8x8xbf16>,
    %38 = vector.extract_strided_slice %3 {offsets = [0, 16], sizes = [8, 8], strides = [1, 1]} : vector<8x96xf32> to vector<8x8xf32>
    %cst_29 = arith.constant 0.353553385 : f32
    %39 = vector.broadcast %cst_29 : f32 to vector<8x8xf32>
    %40 = arith.mulf %38, %39 : vector<8x8xf32>
    %41 = arith.truncf %40 : vector<8x8xf32> to vector<8x8xbf16>
    %c0_30 = arith.constant 0 : index
    %c2 = arith.constant 2 : index
    %c0_31 = arith.constant 0 : index
    %c0_32 = arith.constant 0 : index
    %42 = vector.load %arg4[%c0_30, %c2, %c0_31, %c0_32] : memref<1x4x8x8xbf16, #tpu.memory_space<vmem>>, vector<1x1x8x8xbf16>
    %43 = vector.shape_cast %42 : vector<1x1x8x8xbf16> to vector<8x8xbf16>
    %44 = vector.shape_cast %41 : vector<8x8xbf16> to vector<1x1x8x8xbf16>
    tpu.vector_store %arg4[%c0_30, %c2, %c0_31, %c0_32], %44 {strides = array<i32>} : memref<1x4x8x8xbf16, #tpu.memory_space<vmem>>, vector<1x1x8x8xbf16>,
    %45 = vector.extract_strided_slice %3 {offsets = [0, 48], sizes = [8, 8], strides = [1, 1]} : vector<8x96xf32> to vector<8x8xf32>
    %46 = arith.truncf %45 : vector<8x8xf32> to vector<8x8xbf16>
    %c0_33 = arith.constant 0 : index
    %c2_34 = arith.constant 2 : index
    %c0_35 = arith.constant 0 : index
    %c0_36 = arith.constant 0 : index
    %47 = vector.load %arg5[%c0_33, %c2_34, %c0_35, %c0_36] : memref<1x4x8x8xbf16, #tpu.memory_space<vmem>>, vector<1x1x8x8xbf16>
    %48 = vector.shape_cast %47 : vector<1x1x8x8xbf16> to vector<8x8xbf16>
    %49 = vector.shape_cast %46 : vector<8x8xbf16> to vector<1x1x8x8xbf16>
    tpu.vector_store %arg5[%c0_33, %c2_34, %c0_35, %c0_36], %49 {strides = array<i32>} : memref<1x4x8x8xbf16, #tpu.memory_space<vmem>>, vector<1x1x8x8xbf16>,
    %50 = vector.extract_strided_slice %3 {offsets = [0, 80], sizes = [8, 8], strides = [1, 1]} : vector<8x96xf32> to vector<8x8xf32>
    %51 = arith.truncf %50 : vector<8x8xf32> to vector<8x8xbf16>
    %c0_37 = arith.constant 0 : index
    %c2_38 = arith.constant 2 : index
    %c0_39 = arith.constant 0 : index
    %c0_40 = arith.constant 0 : index
    %52 = vector.load %arg6[%c0_37, %c2_38, %c0_39, %c0_40] : memref<1x4x8x8xbf16, #tpu.memory_space<vmem>>, vector<1x1x8x8xbf16>
    %53 = vector.shape_cast %52 : vector<1x1x8x8xbf16> to vector<8x8xbf16>
    %54 = vector.shape_cast %51 : vector<8x8xbf16> to vector<1x1x8x8xbf16>
    tpu.vector_store %arg6[%c0_37, %c2_38, %c0_39, %c0_40], %54 {strides = array<i32>} : memref<1x4x8x8xbf16, #tpu.memory_space<vmem>>, vector<1x1x8x8xbf16>,
    %55 = vector.extract_strided_slice %3 {offsets = [0, 24], sizes = [8, 8], strides = [1, 1]} : vector<8x96xf32> to vector<8x8xf32>
    %cst_41 = arith.constant 0.353553385 : f32
    %56 = vector.broadcast %cst_41 : f32 to vector<8x8xf32>
    %57 = arith.mulf %55, %56 : vector<8x8xf32>
    %58 = arith.truncf %57 : vector<8x8xf32> to vector<8x8xbf16>
    %c0_42 = arith.constant 0 : index
    %c3 = arith.constant 3 : index
    %c0_43 = arith.constant 0 : index
    %c0_44 = arith.constant 0 : index
    %59 = vector.load %arg4[%c0_42, %c3, %c0_43, %c0_44] : memref<1x4x8x8xbf16, #tpu.memory_space<vmem>>, vector<1x1x8x8xbf16>
    %60 = vector.shape_cast %59 : vector<1x1x8x8xbf16> to vector<8x8xbf16>
    %61 = vector.shape_cast %58 : vector<8x8xbf16> to vector<1x1x8x8xbf16>
    tpu.vector_store %arg4[%c0_42, %c3, %c0_43, %c0_44], %61 {strides = array<i32>} : memref<1x4x8x8xbf16, #tpu.memory_space<vmem>>, vector<1x1x8x8xbf16>,
    %62 = vector.extract_strided_slice %3 {offsets = [0, 56], sizes = [8, 8], strides = [1, 1]} : vector<8x96xf32> to vector<8x8xf32>
    %63 = arith.truncf %62 : vector<8x8xf32> to vector<8x8xbf16>
    %c0_45 = arith.constant 0 : index
    %c3_46 = arith.constant 3 : index
    %c0_47 = arith.constant 0 : index
    %c0_48 = arith.constant 0 : index
    %64 = vector.load %arg5[%c0_45, %c3_46, %c0_47, %c0_48] : memref<1x4x8x8xbf16, #tpu.memory_space<vmem>>, vector<1x1x8x8xbf16>
    %65 = vector.shape_cast %64 : vector<1x1x8x8xbf16> to vector<8x8xbf16>
    %66 = vector.shape_cast %63 : vector<8x8xbf16> to vector<1x1x8x8xbf16>
    tpu.vector_store %arg5[%c0_45, %c3_46, %c0_47, %c0_48], %66 {strides = array<i32>} : memref<1x4x8x8xbf16, #tpu.memory_space<vmem>>, vector<1x1x8x8xbf16>,
    %67 = vector.extract_strided_slice %3 {offsets = [0, 88], sizes = [8, 8], strides = [1, 1]} : vector<8x96xf32> to vector<8x8xf32>
    %68 = arith.truncf %67 : vector<8x8xf32> to vector<8x8xbf16>
    %c0_49 = arith.constant 0 : index
    %c3_50 = arith.constant 3 : index
    %c0_51 = arith.constant 0 : index
    %c0_52 = arith.constant 0 : index
    %69 = vector.load %arg6[%c0_49, %c3_50, %c0_51, %c0_52] : memref<1x4x8x8xbf16, #tpu.memory_space<vmem>>, vector<1x1x8x8xbf16>
    %70 = vector.shape_cast %69 : vector<1x1x8x8xbf16> to vector<8x8xbf16>
    %71 = vector.shape_cast %68 : vector<8x8xbf16> to vector<1x1x8x8xbf16>
    tpu.vector_store %arg6[%c0_49, %c3_50, %c0_51, %c0_52], %71 {strides = array<i32>} : memref<1x4x8x8xbf16, #tpu.memory_space<vmem>>, vector<1x1x8x8xbf16>,
    return
  }
  func.func @transform_0(%arg0: i32, %arg1: i32) -> (i32, i32, i32) {
    %c0_i32 = arith.constant 0 : i32
    %c0_i32_0 = arith.constant 0 : i32
    return %arg0, %arg1, %c0_i32 : i32, i32, i32
  }
  func.func @transform_1(%arg0: i32, %arg1: i32) -> (i32, i32) {
    %c0_i32 = arith.constant 0 : i32
    %c0_i32_0 = arith.constant 0 : i32
    %c0_i32_1 = arith.constant 0 : i32
    return %c0_i32, %c0_i32_0 : i32, i32
  }
  func.func @transform_2(%arg0: i32, %arg1: i32) -> (i32, i32, i32, i32) {
    %c0_i32 = arith.constant 0 : i32
    %c0_i32_0 = arith.constant 0 : i32
    %c0_i32_1 = arith.constant 0 : i32
    return %arg0, %c0_i32, %arg1, %c0_i32_0 : i32, i32, i32, i32
  }
  func.func @transform_3(%arg0: i32, %arg1: i32) -> (i32, i32, i32, i32) {
    %c0_i32 = arith.constant 0 : i32
    %c0_i32_0 = arith.constant 0 : i32
    %c0_i32_1 = arith.constant 0 : i32
    return %arg0, %c0_i32, %arg1, %c0_i32_0 : i32, i32, i32, i32
  }
  func.func @transform_4(%arg0: i32, %arg1: i32) -> (i32, i32, i32, i32) {
    %c0_i32 = arith.constant 0 : i32
    %c0_i32_0 = arith.constant 0 : i32
    %c0_i32_1 = arith.constant 0 : i32
    return %arg0, %c0_i32, %arg1, %c0_i32_0 : i32, i32, i32, i32
  }
}

</mosaic_0001>

<llo_original>
// kernel: tpu_custom_call.1
$region0: #{tpu_custom_call.1}
  #allocation0 [shape = 'u32[]', space=smem, size = 0x4, offset = 0x4, fixed_abs, tag = 'smem constant byte address 0x4 - core index']
  #allocation1 [shape = 'u32[144,128]{1,0:T(1,128)}', space=vmem, size = 0x12000, scoped, tag = 'internal scratch']
  %s0 = inlined_call_operand.hbm [shape: bf16[2,8,32], index: 0, kind: input, shape index: {}]
  %s1 = inlined_call_operand.hbm [shape: bf16[32,96], index: 1, kind: input, shape index: {}]
  %s2 = inlined_call_operand.hbm [shape: bf16[2,4,8,8], index: 2, kind: output, shape index: {0}]
  %s3 = inlined_call_operand.hbm [shape: bf16[2,4,8,8], index: 3, kind: output, shape index: {1}]
  %s4 = inlined_call_operand.hbm [shape: bf16[2,4,8,8], index: 4, kind: output, shape index: {2}]
  %5 = xla_tuple %s2, %s3, %s4
  %s6 = sld [smem:[#allocation0]]
  $region65: #{tpu_custom_call.1} parent=0
    _
  %s8 = ssub.s32 1, %s6
  %s9 = scalar_select 0, %s8, %s6
  $region1: #{tpu_custom_call.1} parent=0
    #allocation2 [shape = 'u8[4096]{0}', space=vmem, size = 0x1000, scoped, tag = 'input window, operand 0']
    #allocation3 [shape = 's32[2]{0}', space=sflag, size = 0x8, scoped, tag = 'scoped memory for tpu_custom_call.1']
    #allocation4 [shape = 's32[2]{0}', space=sflag, size = 0x8, scoped, tag = 'scoped memory for tpu_custom_call.1']
    #allocation5 [shape = 'u8[8192]{0}', space=vmem, size = 0x2000, scoped, tag = 'input window, operand 1, single buffered']
    #allocation6 [shape = 's32[1]{0}', space=sflag, size = 0x4, scoped, tag = 'scoped memory for tpu_custom_call.1']
    #allocation7 [shape = 'u8[16384]{0}', space=vmem, size = 0x4000, scoped, tag = 'output window, operand 0']
    #allocation8 [shape = 'u8[16384]{0}', space=vmem, size = 0x4000, scoped, tag = 'output window, operand 1']
    #allocation9 [shape = 's32[2]{0}', space=sflag, size = 0x8, scoped, tag = 'scoped memory for tpu_custom_call.1']
    #allocation10 [shape = 'u8[16384]{0}', space=vmem, size = 0x4000, scoped, tag = 'output window, operand 2']
    %10 = vsyncpa [#allocation3], 0
    %s11 = scalar_lea.sflag [#allocation3], 1
    %12 = vsyncpa %s11, 0
    %13 = vsyncpa [#allocation6], 0
    %14 = vsyncpa [#allocation4], 0
    %s15 = scalar_lea.sflag [#allocation4], 1
    %16 = vsyncpa %s15, 0
    %17 = vsyncpa [#allocation9], 0
    %s18 = scalar_lea.sflag [#allocation9], 1
    %19 = vsyncpa %s18, 0
    loop: start=0, step=1, limit=4
    $region2: #{tpu_custom_call.1} parent=1 // loop_pre_header
      _
    $region3: #{tpu_custom_call.1} parent=1 // loop_header
      %s21 = sphi 0, %s25
      %p22 = scmp.ge.s32.totalorder %s21, 4
      %s28 = sphi 0, %s40
      %s29 = sphi 0, %s36
      %s30 = sphi 0, %s28
      %s31 = sphi 0, %s29
      %s32 = sphi 0, %s30
      %s33 = sphi 0, %s31
      %s45 = sphi 0, %s47
      %s48 = sphi 0, %s45
      %s49 = sphi 0, %s48
      %s65 = sphi 0, %s49
      %s69 = sphi 0, %s69
      %s71 = sphi 0, %s69
      %s72 = sphi 0, %s71
      %s86 = sphi 0, %s72
      %s94 = sphi 0, %s96
      %s97 = sphi 0, %s94
      %s98 = sphi 0, %s97
      %s114 = sphi 0, %s98
      %s122 = sphi 0, %s124
      %s125 = sphi 0, %s122
      %s126 = sphi 0, %s125
      %s142 = sphi 0, %s126
      %s150 = sphi 0, %s152
      %s153 = sphi 0, %s150
      %s154 = sphi 0, %s153
      %s170 = sphi 0, %s154
    $region4: #{tpu_custom_call.1} parent=1 // loop_header_branch
      %24 = sbr.rel (%p22) target = $region8
    $region5: #{tpu_custom_call.1} parent=1 // loop_body
      %s26 = ssub.s32 %s21, 1
      %s27 = ssub.s32 %s21, 2
      %s34 = sadd.s32 1, %s29
      %p35 = scmp.ge.s32.totalorder %s34, 1
      %s36 = scalar_select %p35, 0, %s34
      %s37 = sadd.s32 1, %s28
      %s38 = scalar_select %p35, %s37, %s28
      %p39 = scmp.ge.s32.totalorder %s38, 2
      %s40 = scalar_select %p39, 0, %s38
      %s41 = ssub.s32 %s28, %s40
      %s42 = ssub.s32 %s29, %s36
      %s43 = sor.u32 %s41, %s42
      %p44 = scmp.eq.s32.totalorder %s43, 0
      %s46 = sadd.s32 %s45, 1
      %s47 = scalar_select %p44, %s45, %s46
      %p50 = pneg %p44
      %p51 = scmp.eq.s32.totalorder %s21, 1
      %p52 = por %p50, %p51
      %p53 = scmp.ne.s32.totalorder %s45, %s48
      %p54 = scmp.eq.s32.totalorder %s21, 0
      %p55 = por %p53, %p54
      %p56 = scmp.ne.s32.totalorder %s45, %s48
      %p57 = scmp.eq.s32.totalorder %s26, 1
      %p58 = por %p56, %p57
      %p59 = scmp.ne.s32.totalorder %s48, %s49
      %p60 = scmp.eq.s32.totalorder %s26, 0
      %p61 = por %p59, %p60
      %p62 = scmp.ne.s32.totalorder %s48, %s49
      %p63 = scmp.eq.s32.totalorder %s27, 1
      %p64 = por %p62, %p63
      %p66 = scmp.ne.s32.totalorder %s49, %s65
      %p67 = scmp.eq.s32.totalorder %s27, 0
      %p68 = por %p66, %p67
      %s70 = sadd.s32 %s69, 1
      %p73 = scmp.eq.s32.totalorder %s21, 1
      %p74 = scmp.ne.s32.totalorder %s69, %s71
      %p75 = scmp.eq.s32.totalorder %s21, 0
      %p76 = por %p74, %p75
      %p77 = scmp.ne.s32.totalorder %s69, %s71
      %p78 = scmp.eq.s32.totalorder %s26, 1
      %p79 = por %p77, %p78
      %p80 = scmp.ne.s32.totalorder %s71, %s72
      %p81 = scmp.eq.s32.totalorder %s26, 0
      %p82 = por %p80, %p81
      %p83 = scmp.ne.s32.totalorder %s71, %s72
      %p84 = scmp.eq.s32.totalorder %s27, 1
      %p85 = por %p83, %p84
      %p87 = scmp.ne.s32.totalorder %s72, %s86
      %p88 = scmp.eq.s32.totalorder %s27, 0
      %p89 = por %p87, %p88
      %s90 = ssub.s32 %s28, %s40
      %s91 = ssub.s32 %s29, %s36
      %s92 = sor.u32 %s90, %s91
      %p93 = scmp.eq.s32.totalorder %s92, 0
      %s95 = sadd.s32 %s94, 1
      %s96 = scalar_select %p93, %s94, %s95
      %p99 = pneg %p93
      %p100 = scmp.eq.s32.totalorder %s21, 1
      %p101 = por %p99, %p100
      %p102 = scmp.ne.s32.totalorder %s94, %s97
      %p103 = scmp.eq.s32.totalorder %s21, 0
      %p104 = por %p102, %p103
      %p105 = scmp.ne.s32.totalorder %s94, %s97
      %p106 = scmp.eq.s32.totalorder %s26, 1
      %p107 = por %p105, %p106
      %p108 = scmp.ne.s32.totalorder %s97, %s98
      %p109 = scmp.eq.s32.totalorder %s26, 0
      %p110 = por %p108, %p109
      %p111 = scmp.ne.s32.totalorder %s97, %s98
      %p112 = scmp.eq.s32.totalorder %s27, 1
      %p113 = por %p111, %p112
      %p115 = scmp.ne.s32.totalorder %s98, %s114
      %p116 = scmp.eq.s32.totalorder %s27, 0
      %p117 = por %p115, %p116
      %s118 = ssub.s32 %s28, %s40
      %s119 = ssub.s32 %s29, %s36
      %s120 = sor.u32 %s118, %s119
      %p121 = scmp.eq.s32.totalorder %s120, 0
      %s123 = sadd.s32 %s122, 1
      %s124 = scalar_select %p121, %s122, %s123
      %p127 = pneg %p121
      %p128 = scmp.eq.s32.totalorder %s21, 1
      %p129 = por %p127, %p128
      %p130 = scmp.ne.s32.totalorder %s122, %s125
      %p131 = scmp.eq.s32.totalorder %s21, 0
      %p132 = por %p130, %p131
      %p133 = scmp.ne.s32.totalorder %s122, %s125
      %p134 = scmp.eq.s32.totalorder %s26, 1
      %p135 = por %p133, %p134
      %p136 = scmp.ne.s32.totalorder %s125, %s126
      %p137 = scmp.eq.s32.totalorder %s26, 0
      %p138 = por %p136, %p137
      %p139 = scmp.ne.s32.totalorder %s125, %s126
      %p140 = scmp.eq.s32.totalorder %s27, 1
      %p141 = por %p139, %p140
      %p143 = scmp.ne.s32.totalorder %s126, %s142
      %p144 = scmp.eq.s32.totalorder %s27, 0
      %p145 = por %p143, %p144
      %s146 = ssub.s32 %s28, %s40
      %s147 = ssub.s32 %s29, %s36
      %s148 = sor.u32 %s146, %s147
      %p149 = scmp.eq.s32.totalorder %s148, 0
      %s151 = sadd.s32 %s150, 1
      %s152 = scalar_select %p149, %s150, %s151
      %p155 = pneg %p149
      %p156 = scmp.eq.s32.totalorder %s21, 1
      %p157 = por %p155, %p156
      %p158 = scmp.ne.s32.totalorder %s150, %s153
      %p159 = scmp.eq.s32.totalorder %s21, 0
      %p160 = por %p158, %p159
      %p161 = scmp.ne.s32.totalorder %s150, %s153
      %p162 = scmp.eq.s32.totalorder %s26, 1
      %p163 = por %p161, %p162
      %p164 = scmp.ne.s32.totalorder %s153, %s154
      %p165 = scmp.eq.s32.totalorder %s26, 0
      %p166 = por %p164, %p165
      %p167 = scmp.ne.s32.totalorder %s153, %s154
      %p168 = scmp.eq.s32.totalorder %s27, 1
      %p169 = por %p167, %p168
      %p171 = scmp.ne.s32.totalorder %s154, %s170
      %p172 = scmp.eq.s32.totalorder %s27, 0
      %p173 = por %p171, %p172
      %p174 = scmp.le.s32.totalorder 1, %s21
      %p175 = scmp.lt.s32.totalorder %s21, 3
      %p176 = pnand %p174, %p175
      %p177 = pneg %p176
      // Predicated region
      $region9: #{tpu_custom_call.1} parent=5 // pred_check
        _
      $region10: #{tpu_custom_call.1} parent=5 // pred_check_branch
        %179 = sbr.rel (%p176) target = $region12
      $region11: #{tpu_custom_call.1} parent=5 // pred_region
        %s180 = ssub.s32 %s21, 1
        // Predicated region
        $region13: #{tpu_custom_call.1} parent=11 // pred_check
          %p181 = pneg %p82
        $region14: #{tpu_custom_call.1} parent=11 // pred_check_branch
          %183 = sbr.rel (%p181) target = $region16
        $region15: #{tpu_custom_call.1} parent=11 // pred_region
          %s185 = ssub.s32 256, 256
          %186 = vsyncadd [#allocation6], %s185
          %s187 = sshll.u32 [#allocation5], 4
          %s188 = int_to_ptr.vmem [resolvable:$true] %s187
          %193 = dma.hbm_to_vmem [thread:$0]  %s1, 256, %s188, [#allocation6], 64, 64, 4
        $region16: #{tpu_custom_call.1} parent=11 // pred_fallthru
          _
      $region12: #{tpu_custom_call.1} parent=5 // pred_fallthru
        _
      %p194 = scmp.lt.s32.totalorder %s21, 2
      // Predicated region
      $region17: #{tpu_custom_call.1} parent=5 // pred_check
        %p195 = pneg %p194
      $region18: #{tpu_custom_call.1} parent=5 // pred_check_branch
        %197 = sbr.rel (%p195) target = $region20
      $region19: #{tpu_custom_call.1} parent=5 // pred_region
        // Predicated region
        $region21: #{tpu_custom_call.1} parent=19 // pred_check
          %p198 = pneg %p55
        $region22: #{tpu_custom_call.1} parent=19 // pred_check_branch
          %200 = sbr.rel (%p198) target = $region24
        $region23: #{tpu_custom_call.1} parent=19 // pred_region
          %s201 = sand.u32 %s45, 1
          %s202 = scalar_lea.sflag [#allocation3], %s201
          %s203 = sand.u32 %s45, 1
          %s204 = smul.addr %s203, 4
          %s205 = scalar_lea.vmem [#allocation2], %s204
          %s207 = ssub.s32 64, 64
          %208 = vsyncadd %s202, %s207
          %s209 = sadd.s32 %s29, %s28
          %s210 = smul.addr %s209, 64
          %s211 = scalar_lea.hbm %s0, %s210
          %s213 = sshll.u32 %s205, 4
          %s214 = int_to_ptr.vmem [resolvable:$true] %s213
          %216 = dma.hbm_to_vmem [thread:$0]  %s211, 64, %s214, %s202
        $region24: #{tpu_custom_call.1} parent=19 // pred_fallthru
          _
      $region20: #{tpu_custom_call.1} parent=5 // pred_fallthru
        _
      %p217 = scmp.le.s32.totalorder 1, %s21
      %p218 = scmp.lt.s32.totalorder %s21, 3
      %p219 = pnand %p217, %p218
      %p220 = pneg %p219
      // Predicated region
      $region25: #{tpu_custom_call.1} parent=5 // pred_check
        _
      $region26: #{tpu_custom_call.1} parent=5 // pred_check_branch
        %222 = sbr.rel (%p219) target = $region28
      $region27: #{tpu_custom_call.1} parent=5 // pred_region
        %s223 = ssub.s32 %s21, 1
        %s224 = sand.u32 %s48, 1
        %s225 = scalar_lea.sflag [#allocation3], %s224
        %s226 = sand.u32 %s48, 1
        %s227 = smul.addr %s226, 4
        %s228 = scalar_lea.vmem [#allocation2], %s227
        // Predicated region
        $region29: #{tpu_custom_call.1} parent=27 // pred_check
          %p229 = pneg %p61
        $region30: #{tpu_custom_call.1} parent=27 // pred_check_branch
          %231 = sbr.rel (%p229) target = $region32
        $region31: #{tpu_custom_call.1} parent=27 // pred_region
          %232 = dma.done %s225, 64
        $region32: #{tpu_custom_call.1} parent=27 // pred_fallthru
          _
        // Predicated region
        $region33: #{tpu_custom_call.1} parent=27 // pred_check
          %p233 = pneg %p82
        $region34: #{tpu_custom_call.1} parent=27 // pred_check_branch
          %235 = sbr.rel (%p233) target = $region36
        $region35: #{tpu_custom_call.1} parent=27 // pred_region
          %236 = dma.done [#allocation6], 256
        $region36: #{tpu_custom_call.1} parent=27 // pred_fallthru
          _
        %s237 = sand.u32 %s48, 1
        %s238 = scalar_lea.sflag [#allocation3], %s237
        %s239 = sand.u32 %s48, 1
        %s240 = smul.addr %s239, 4
        %s241 = scalar_lea.vmem [#allocation2], %s240
        %p242 = pneg %p61
        %p243 = pneg %p58
        %p244 = pneg %p82
        %p245 = pneg %p79
        %p246 = pneg %p110
        %p247 = pneg %p107
        %s248 = sand.u32 %s97, 1
        %s249 = scalar_lea.sflag [#allocation4], %s248
        %s250 = sand.u32 %s97, 1
        %s251 = smul.addr %s250, 16
        %s252 = scalar_lea.vmem [#allocation7], %s251
        %p253 = pneg %p138
        %p254 = pneg %p135
        %s255 = sand.u32 %s26, 1
        %s256 = scalar_lea.sflag [#allocation9], %s255
        %s257 = sand.u32 %s125, 1
        %s258 = smul.addr %s257, 16
        %s259 = scalar_lea.vmem [#allocation8], %s258
        %p260 = pneg %p166
        %p261 = pneg %p163
        %s262 = sand.u32 %s26, 1
        %s263 = scalar_lea.sflag [#allocation9], %s262
        %s264 = sand.u32 %s153, 1
        %s265 = smul.addr %s264, 16
        %s266 = scalar_lea.vmem [#allocation10], %s265
        %v268 = vld [vmem:[%s228] sm:$0xf]
        %v269 = vld [vmem:[#allocation5] sm:$0xf]
        %v270 = vld [vmem:[#allocation5 + $0x4] sm:$0xf]
        %v271 = vld [vmem:[#allocation5 + $0x8] sm:$0xf]
        %v272 = vld [vmem:[#allocation5 + $0xc] sm:$0xf]
        %v277 = vunpack.c.l.b16 %v269
        %v278 = vunpack.c.l.b16 %v270
        %v279 = vunpack.c.l.b16 %v271
        %v280 = vunpack.c.l.b16 %v272
        %v281 = vpack.c.b16 %v278, %v277
        %v282 = vpack.c.b16 %v280, %v279
        %vm285 = vcmask 261120
        %v287 = vsel %vm285, %v268, 0
        %289 = vmatprep.subr.bf16.mxu0 0
        %290 = vmatpush1.bf16.msra.mxu0 %v281
        %291 = vmatprep.subr.bf16.mxu0 0
        %292 = vmatpush1.bf16.msra.mxu0 %v282
        %293 = vmatprep.subr.bf16.mxu0 0
        %294 = vmatpush1.bf16.msra.mxu0 0
        %295 = vmatprep.subr.bf16.mxu0 0
        %296 = vmatpush1.bf16.msra.mxu0 0
        %297 = vmatprep.subr.bf16.mxu0 0
        %298 = vmatpush1.bf16.msra.mxu0 0
        %299 = vmatprep.subr.bf16.mxu0 0
        %300 = vmatpush1.bf16.msra.mxu0 0
        %301 = vmatprep.subr.bf16.mxu0 0
        %302 = vmatpush1.bf16.msra.mxu0 0
        %303 = vmatprep.subr.bf16.mxu0 0
        %304 = vmatpush1.bf16.msra.mxu0 0
        %305 = vmatprep.subr.bf16.mxu0 0
        %306 = vmatpush1.bf16.msra.mxu0 0
        %307 = vmatprep.subr.bf16.mxu0 0
        %308 = vmatpush1.bf16.msra.mxu0 0
        %309 = vmatprep.subr.bf16.mxu0 0
        %310 = vmatpush1.bf16.msra.mxu0 0
        %311 = vmatprep.subr.bf16.mxu0 0
        %312 = vmatpush1.bf16.msra.mxu0 0
        %313 = vmatprep.subr.bf16.mxu0 0
        %314 = vmatpush1.bf16.msra.mxu0 0
        %315 = vmatprep.subr.bf16.mxu0 0
        %316 = vmatpush1.bf16.msra.mxu0 0
        %317 = vmatprep.subr.bf16.mxu0 0
        %318 = vmatpush1.bf16.msra.mxu0 0
        %319 = vmatprep.subr.bf16.mxu0 0
        %320 = vmatpush1.bf16.msra.mxu0 0
        %321 = vmatprep.mubr.bf16.mxu0 0
        %322 = vmatmul.mubr.bf16.gmra.mrb[0].mxu0 %v287
        %v323 = vpop.f32.mrb[0].mxu0
        %v324 = vadd.f32 0.0, %v323
        %v325 = vpop.f32.mrb[0].mxu0
        %v326 = vpop.f32.mrb[0].mxu0
        %v327 = vpop.f32.mrb[0].mxu0
        %328 = vdwg.mxu0
        %v329 = vmul.f32 %v324, 0.35355338
        %v330 = vpack.c.bf16 %v329, %v329
        %vm331 = vcmask 60416
        %332 = vst.msk [vmem:[%s252] sm:$0xf] %vm331, %v330
        %v333 = vpack.c.bf16 %v324, %v324
        %v335 = vunpack.c.l.b16 %v333
        %v336 = vpack.c.b16 %v335, %v335
        %337 = vrot.lane.b32.xlu0 %v336, 96
        %v338 = vpop.permute.xlu0 %337
        %340 = vst.msk [vmem:[%s259] sm:$0xf] %vm331, %v338
        %341 = vrot.lane.b32.xlu0 %v336, 64
        %v342 = vpop.permute.xlu0 %341
        %344 = vst.msk [vmem:[%s266] sm:$0xf] %vm331, %v342
        %v346 = vunpack.c.l.b16 %v330
        %v347 = vpack.c.b16 %v346, %v346
        %348 = vrot.lane.b32.xlu0 %v347, 120
        %v349 = vpop.permute.xlu0 %348
        %s351 = scalar_lea.vmem %s252, 4 [#allocation7]
        %352 = vst.msk [vmem:[%s351] sm:$0xf] %vm331, %v349
        %353 = vrot.lane.b32.xlu0 %v336, 88
        %v354 = vpop.permute.xlu0 %353
        %s356 = scalar_lea.vmem %s259, 4 [#allocation8]
        %357 = vst.msk [vmem:[%s356] sm:$0xf] %vm331, %v354
        %358 = vrot.lane.b32.xlu0 %v336, 56
        %v359 = vpop.permute.xlu0 %358
        %s361 = scalar_lea.vmem %s266, 4 [#allocation10]
        %362 = vst.msk [vmem:[%s361] sm:$0xf] %vm331, %v359
        %363 = vrot.lane.b32.xlu0 %v347, 112
        %v364 = vpop.permute.xlu0 %363
        %s366 = scalar_lea.vmem %s252, 8 [#allocation7]
        %367 = vst.msk [vmem:[%s366] sm:$0xf] %vm331, %v364
        %368 = vrot.lane.b32.xlu0 %v336, 80
        %v369 = vpop.permute.xlu0 %368
        %s371 = scalar_lea.vmem %s259, 8 [#allocation8]
        %372 = vst.msk [vmem:[%s371] sm:$0xf] %vm331, %v369
        %373 = vrot.lane.b32.xlu0 %v336, 48
        %v374 = vpop.permute.xlu0 %373
        %s376 = scalar_lea.vmem %s266, 8 [#allocation10]
        %377 = vst.msk [vmem:[%s376] sm:$0xf] %vm331, %v374
        %378 = vrot.lane.b32.xlu0 %v347, 104
        %v379 = vpop.permute.xlu0 %378
        %s381 = scalar_lea.vmem %s252, 12 [#allocation7]
        %382 = vst.msk [vmem:[%s381] sm:$0xf] %vm331, %v379
        %383 = vrot.lane.b32.xlu0 %v336, 72
        %v384 = vpop.permute.xlu0 %383
        %s386 = scalar_lea.vmem %s259, 12 [#allocation8]
        %387 = vst.msk [vmem:[%s386] sm:$0xf] %vm331, %v384
        %388 = vrot.lane.b32.xlu0 %v336, 40
        %v389 = vpop.permute.xlu0 %388
        %s391 = scalar_lea.vmem %s266, 12 [#allocation10]
        %392 = vst.msk [vmem:[%s391] sm:$0xf] %vm331, %v389
        %s393 = sand.u32 %s97, 1
        %s394 = scalar_lea.sflag [#allocation4], %s393
        %s395 = sand.u32 %s97, 1
        %s396 = smul.addr %s395, 16
        %s397 = scalar_lea.vmem [#allocation7], %s396
        %s398 = sand.u32 %s26, 1
        %s399 = scalar_lea.sflag [#allocation9], %s398
        %s400 = sand.u32 %s125, 1
        %s401 = smul.addr %s400, 16
        %s402 = scalar_lea.vmem [#allocation8], %s401
        %s403 = sand.u32 %s26, 1
        %s404 = scalar_lea.sflag [#allocation9], %s403
        %s405 = sand.u32 %s153, 1
        %s406 = smul.addr %s405, 16
        %s407 = scalar_lea.vmem [#allocation10], %s406
        // Predicated region
        $region37: #{tpu_custom_call.1} parent=27 // pred_check
          %p408 = pneg %p107
        $region38: #{tpu_custom_call.1} parent=27 // pred_check_branch
          %410 = sbr.rel (%p408) target = $region40
        $region39: #{tpu_custom_call.1} parent=27 // pred_region
          %s412 = ssub.s32 256, 256
          %413 = vsyncadd %s394, %s412
          %s414 = smul.addr %s30, 4
          %s415 = sadd.s32 %s31, %s414
          %s416 = smul.addr %s415, 64
          %s417 = scalar_lea.hbm %s2, %s416
          %s418 = sshll.u32 %s397, 4
          %s419 = int_to_ptr.vmem [resolvable:$true] %s418
          %424 = dma.vmem_to_hbm [thread:$0]  %s419, 256, %s417, %s394, 64, 64, 4
        $region40: #{tpu_custom_call.1} parent=27 // pred_fallthru
          _
        // Predicated region
        $region41: #{tpu_custom_call.1} parent=27 // pred_check
          %p425 = pneg %p135
        $region42: #{tpu_custom_call.1} parent=27 // pred_check_branch
          %427 = sbr.rel (%p425) target = $region44
        $region43: #{tpu_custom_call.1} parent=27 // pred_region
          %s429 = ssub.s32 256, 256
          %430 = vsyncadd %s399, %s429
          %s431 = smul.addr %s30, 4
          %s432 = sadd.s32 %s31, %s431
          %s433 = smul.addr %s432, 64
          %s434 = scalar_lea.hbm %s3, %s433
          %s435 = sshll.u32 %s402, 4
          %s436 = int_to_ptr.vmem [resolvable:$true] %s435
          %441 = dma.vmem_to_hbm [thread:$0]  %s436, 256, %s434, %s399, 64, 64, 4
        $region44: #{tpu_custom_call.1} parent=27 // pred_fallthru
          _
        // Predicated region
        $region45: #{tpu_custom_call.1} parent=27 // pred_check
          %p442 = pneg %p163
        $region46: #{tpu_custom_call.1} parent=27 // pred_check_branch
          %444 = sbr.rel (%p442) target = $region48
        $region47: #{tpu_custom_call.1} parent=27 // pred_region
          %s446 = ssub.s32 256, 256
          %447 = vsyncadd %s404, %s446
          %s448 = smul.addr %s30, 4
          %s449 = sadd.s32 %s31, %s448
          %s450 = smul.addr %s449, 64
          %s451 = scalar_lea.hbm %s4, %s450
          %s452 = sshll.u32 %s407, 4
          %s453 = int_to_ptr.vmem [resolvable:$true] %s452
          %458 = dma.vmem_to_hbm [thread:$0]  %s453, 256, %s451, %s404, 64, 64, 4
        $region48: #{tpu_custom_call.1} parent=27 // pred_fallthru
          _
      $region28: #{tpu_custom_call.1} parent=5 // pred_fallthru
        _
      %p459 = scmp.le.s32.totalorder 2, %s21
      // Predicated region
      $region49: #{tpu_custom_call.1} parent=5 // pred_check
        %p460 = pneg %p459
      $region50: #{tpu_custom_call.1} parent=5 // pred_check_branch
        %462 = sbr.rel (%p460) target = $region52
      $region51: #{tpu_custom_call.1} parent=5 // pred_region
        %s463 = ssub.s32 %s21, 2
        // Predicated region
        $region53: #{tpu_custom_call.1} parent=51 // pred_check
          %p464 = pneg %p113
        $region54: #{tpu_custom_call.1} parent=51 // pred_check_branch
          %466 = sbr.rel (%p464) target = $region56
        $region55: #{tpu_custom_call.1} parent=51 // pred_region
          %s467 = sand.u32 %s98, 1
          %s468 = scalar_lea.sflag [#allocation4], %s467
          %s469 = sand.u32 %s98, 1
          %s470 = smul.addr %s469, 16
          %s471 = scalar_lea.vmem [#allocation7], %s470
          %472 = dma.done %s468, 256
        $region56: #{tpu_custom_call.1} parent=51 // pred_fallthru
          _
        // Predicated region
        $region57: #{tpu_custom_call.1} parent=51 // pred_check
          %p473 = pneg %p141
        $region58: #{tpu_custom_call.1} parent=51 // pred_check_branch
          %475 = sbr.rel (%p473) target = $region60
        $region59: #{tpu_custom_call.1} parent=51 // pred_region
          %s476 = sand.u32 %s27, 1
          %s477 = scalar_lea.sflag [#allocation9], %s476
          %s478 = sand.u32 %s126, 1
          %s479 = smul.addr %s478, 16
          %s480 = scalar_lea.vmem [#allocation8], %s479
          %481 = dma.done %s477, 256
        $region60: #{tpu_custom_call.1} parent=51 // pred_fallthru
          _
        // Predicated region
        $region61: #{tpu_custom_call.1} parent=51 // pred_check
          %p482 = pneg %p169
        $region62: #{tpu_custom_call.1} parent=51 // pred_check_branch
          %484 = sbr.rel (%p482) target = $region64
        $region63: #{tpu_custom_call.1} parent=51 // pred_region
          %s485 = sand.u32 %s27, 1
          %s486 = scalar_lea.sflag [#allocation9], %s485
          %s487 = sand.u32 %s154, 1
          %s488 = smul.addr %s487, 16
          %s489 = scalar_lea.vmem [#allocation10], %s488
          %490 = dma.done %s486, 256
        $region64: #{tpu_custom_call.1} parent=51 // pred_fallthru
          _
      $region52: #{tpu_custom_call.1} parent=5 // pred_fallthru
        _
    $region6: #{tpu_custom_call.1} parent=1 // loop_footer
      %s25 = sadd.s32 1, %s21
    $region7: #{tpu_custom_call.1} parent=1 // loop_footer_branch
      %20 = sbr.rel target = $region3
    $region8: #{tpu_custom_call.1} parent=1 // loop_exit
      _
    %491 = vsyncpa [#allocation3], 1
    %s492 = scalar_lea.sflag [#allocation3], 1
    %493 = vsyncpa %s492, 1
    %494 = vsyncpa [#allocation6], 1
    %495 = vsyncpa [#allocation4], 1
    %s496 = scalar_lea.sflag [#allocation4], 1
    %497 = vsyncpa %s496, 1
    %498 = vsyncpa [#allocation9], 1
    %s499 = scalar_lea.sflag [#allocation9], 1
    %500 = vsyncpa %s499, 1

</llo_original>
